<compile_context>
chip_gen: v5e
topology: v5e:2x2
jax: 0.10.0
libtpu: 0.0.40
codegen_flags: <defaults>
</compile_context>

<pallas_src>
import functools

import numpy as np
import jax
import jax.numpy as jnp
from jax.experimental import pallas as pl
from jax.experimental.pallas import tpu as pltpu


# ----------------------------------------------------------------------------
# Index set for the additive IFWM triplets.
# ----------------------------------------------------------------------------
def _triplet_index(M: int, rho: float):
    L = M // 2
    S = []
    for m in range(-L, L + 1):
        for n in range(-L, L + 1):
            if m == 0 or n == 0:          # m*n == 0 terms handled by the phase path
                continue
            if abs(m * n) > rho * L:      # perturbation truncation
                continue
            if abs(m + n) > L:            # keep E_{m+n} inside the window
                continue
            S.append((m, n))
    return S


def _round_up(x: int, m: int) -> int:
    return (x + m - 1) // m * m


# ----------------------------------------------------------------------------
# Pallas kernel: one grid step == one lane-dense batch tile (B on lanes).
# ----------------------------------------------------------------------------
def _ampbc_conv_kernel(scale_ref, x_ref, sel_ref, wa_ref, wb_ref, h1_ref,
                       h2_ref, cb_ref, out_ref, *, Nmodes: int, M: int,
                       nSp: int, C00: float):
    N = Nmodes
    NM = N * M                      # rows per re/im block of the field slab
    NB = N * nSp                    # rows per triplet group (stacked over modes)

    def flip(a):                    # a[p] -> a[(p-1) % N]   (other polarisation)
        if N == 1:
            return a
        return jnp.concatenate([a[N - 1:N], a[:N - 1]], axis=0)

    scale = scale_ref[...]                          # [2, B]: sqrt(P), 1/sqrt(P)
    sp, inv_sp = scale[0:1], scale[1:2]

    X = x_ref[...]                                  # [2*N*M, B] raw field (re; im)
    E = X * sp                                      # sqrt(P)-scaled field, one op

    # --- (1) single MXU matmul: triplet gather (both modes, re/im) + centre
    #         taps + ComplexConv1d rows (conv folded in; un-scaled at the end).
    G = jnp.dot(sel_ref[...], E, preferred_element_type=jnp.float32)

    Ar, Br, Cr = G[0:NB], G[NB:2 * NB], G[2 * NB:3 * NB]
    Ai, Bi, Ci = G[3 * NB:4 * NB], G[4 * NB:5 * NB], G[5 * NB:6 * NB]
    c0 = 6 * NB
    Ecr, Eci = G[c0:c0 + N], G[c0 + N:c0 + 2 * N]           # centre of E_p
    convr, convi = G[c0 + 2 * N:c0 + 3 * N], G[c0 + 3 * N:c0 + 4 * N]

    # --- (2) additive IFWM: triplet products (stacked over modes) + E1 matmuls
    ABr = Ar * Br - Ai * Bi
    ABi = Ar * Bi + Ai * Br
    Tr = ABr * Cr + ABi * Ci                       # Re(E_m E_n conj(E_{m+n}))
    Ti = ABi * Cr - ABr * Ci                       # Im(...)
    E1 = (jnp.dot(wa_ref[...], Tr, preferred_element_type=jnp.float32)
          + jnp.dot(wb_ref[...], Ti, preferred_element_type=jnp.float32))
    E1r, E1i = E1[0:N], E1[N:2 * N]                # [N, B] each

    # --- (3) multiplicative SPM/XPM phase: E2 = E_0 * exp(i*phi) --------------
    Esq = E * E                                    # one square on the whole slab
    g = jnp.dot(h1_ref[...], Esq, preferred_element_type=jnp.float32)   # h1.|E_p|^2
    zcv1 = 2.0 * g + flip(g)                       # 2*pw_p + pw_q filtered by h1
    pwc = Ecr * Ecr + Eci * Eci                    # centre power |E_p[L]|^2
    phi = C00 * pwc + 2.0 * zcv1
    cphi, sphi = jnp.cos(phi), jnp.sin(phi)
    E2r = Ecr * cphi - Eci * sphi
    E2i = Ecr * sphi + Eci * cphi

    # --- (4) cross-pol IXPM: compute mode-0 product once, conj symmetry for p=1
    q0 = (0 - 1) % N
    Er0, Ei0 = E[0:M], E[NM:NM + M]
    Erq, Eiq = E[q0 * M:(q0 + 1) * M], E[NM + q0 * M:NM + (q0 + 1) * M]
    Axr = Er0 * Erq + Ei0 * Eiq                    # Re(E_0 conj(E_q))
    Axi = Ei0 * Erq - Er0 * Eiq
    z2r0 = jnp.dot(h2_ref[...], Axr, preferred_element_type=jnp.float32)  # [1, B]
    z2i0 = jnp.dot(h2_ref[...], Axi, preferred_element_type=jnp.float32)
    if N == 1:
        z2r, z2i = z2r0, z2i0
    else:                                          # z2_1 = conj(z2_0) for 2 pols
        z2r = jnp.concatenate([z2r0] * N, axis=0)
        z2i = jnp.concatenate([z2i0] + [-z2i0] * (N - 1), axis=0)
    Rcr, Rci = flip(Ecr), flip(Eci)                # centre of the other pol
    tr = z2r * Rcr - z2i * Rci
    ti = z2r * Rci + z2i * Rcr
    E3r, E3i = -ti, tr                             # multiply by 1j

    # --- final assembly: (pbc + conv_on_E) * 1/sqrt(P) + bias, single store ---
    cb = cb_ref[...]                               # [2N, 1]
    outr = (E1r + E2r + E3r + convr) * inv_sp + cb[0:N]
    outi = (E1i + E2i + E3i + convi) * inv_sp + cb[N:2 * N]
    out_ref[...] = jnp.concatenate([outr, outi], axis=0)


# ----------------------------------------------------------------------------
# Wrapper: layout plumbing (batch -> lanes), static tables, pallas_call.
# ----------------------------------------------------------------------------
def eq_ampbc_add_conv(x, task_info, params, *, M: int, rho: float, b_tile=None):
    """x: [B, L, Nmodes] complex64, task_info: [B, 4] float32 -> [B, Nmodes] complex64."""
    B, Lseq, Nmodes = x.shape
    assert Nmodes in (1, 2)
    L = M // 2
    c = Lseq // 2
    assert Lseq == M, "conv branch requires L == M so the Conv1d output length is 1"

    N = Nmodes
    NM = N * M
    NC = 2 * NM                                          # rows of the packed field slab

    # Lane-dense batch tile (multiple of 128). Target ~8 grid steps so both v7x
    # TensorCores get work and DMA of step i+1 overlaps compute of step i on
    # single-TC chips; clamp to <=2048 so the per-step working set stays well
    # under the default scoped-VMEM budgets (16/32/32 MiB on v5e/v6e/v7x).
    if b_tile is None:
        target = _round_up((B + 7) // 8, 128)
        b_tile = max(128, min(2048, target, _round_up(B, 128)))
    assert b_tile % 128 == 0
    B_pad = _round_up(B, b_tile)

    # --- field window, packed [2*Nmodes*M, B] (re block then im block), B on lanes
    xw = x[:, c - L:c + L + 1, :]                        # [B, M, N]
    x_cf = jnp.transpose(xw, (2, 1, 0))                  # [N, M, B]
    x_p = jnp.concatenate([jnp.real(x_cf), jnp.imag(x_cf)], axis=0)   # [2N, M, B]
    x_p = x_p.reshape(NC, B).astype(jnp.float32)
    x_p = jnp.pad(x_p, ((0, 0), (0, B_pad - B)))

    # --- per-batch sqrt(P) and 1/sqrt(P) (padded lanes -> 1.0, keeps them finite)
    P = 10.0 ** (task_info[:, 0] / 10.0) / Nmodes        # dBm -> mW per mode
    sp = jnp.sqrt(P).astype(jnp.float32)
    scale = jnp.stack([sp, 1.0 / sp], axis=0)
    scale = jnp.pad(scale, ((0, 0), (0, B_pad - B)), constant_values=1.0)

    # --- static triplet index set ---------------------------------------------
    S = _triplet_index(M, rho)
    nS = len(S)
    nSp = max(8, _round_up(nS, 8))                       # sublane-aligned blocks
    NB = N * nSp
    idx_m = np.array([L + m for m, n in S])
    idx_n = np.array([L + n for m, n in S])
    idx_mn = np.array([L + m + n for m, n in S])

    # --- single selection/weight matrix for the fused gather matmul -----------
    # Row layout: [Ar | Br | Cr | Ai | Bi | Ci] (each Nmodes*nSp rows, stacked
    # over modes), then Ecr, Eci centre taps (Nmodes each), then the
    # ComplexConv1d real/imag rows (Nmodes each).
    RG = 6 * NB + 4 * N
    RG_pad = _round_up(RG, 8)
    sel_np = np.zeros((RG_pad, NC), np.float32)
    for p in range(N):
        r0 = p * nSp
        sel_np[0 * NB + r0 + np.arange(nS), p * M + idx_m] = 1.0
        sel_np[1 * NB + r0 + np.arange(nS), p * M + idx_n] = 1.0
        sel_np[2 * NB + r0 + np.arange(nS), p * M + idx_mn] = 1.0
        sel_np[3 * NB + r0 + np.arange(nS), NM + p * M + idx_m] = 1.0
        sel_np[4 * NB + r0 + np.arange(nS), NM + p * M + idx_n] = 1.0
        sel_np[5 * NB + r0 + np.arange(nS), NM + p * M + idx_mn] = 1.0
        sel_np[6 * NB + p, p * M + L] = 1.0              # centre of Er_p
        sel_np[6 * NB + N + p, NM + p * M + L] = 1.0     # centre of Ei_p
    sel = jnp.asarray(sel_np)

    # ComplexConv1d folded into the same matmul: conv(x) == conv(E) * 1/sqrt(P)
    cw = params["conv_w"]                                # [N, N, M] complex
    wr = jnp.real(cw).reshape(N, NM).astype(jnp.float32)
    wi = jnp.imag(cw).reshape(N, NM).astype(jnp.float32)
    c0 = 6 * NB
    sel = sel.at[c0 + 2 * N:c0 + 3 * N].set(jnp.concatenate([wr, -wi], axis=1))
    sel = sel.at[c0 + 3 * N:c0 + 4 * N].set(jnp.concatenate([wi, wr], axis=1))

    # --- IFWM weight matrices (real/imag block form) for the E1 matmuls --------
    fwm = params["fwm_w"]                                # [fwm_modes, nS] complex
    Wm = fwm[np.minimum(np.arange(N), fwm.shape[0] - 1)]
    wa = jnp.zeros((2 * N, NB), jnp.float32)
    wb = jnp.zeros((2 * N, NB), jnp.float32)
    for p in range(N):
        wr_p = jnp.real(Wm[p]).astype(jnp.float32)
        wi_p = jnp.imag(Wm[p]).astype(jnp.float32)
        sl = slice(p * nSp, p * nSp + nS)                # padded columns stay 0
        wa = wa.at[p, sl].set(wr_p).at[N + p, sl].set(wi_p)
        wb = wb.at[p, sl].set(-wi_p).at[N + p, sl].set(wr_p)

    # --- zero-centre XPM filters -> MXU filter matrices ------------------------
    h1 = params["xpm_h1"].at[L].set(0.0).astype(jnp.float32)
    h2 = params["xpm_h2"].at[L].set(0.0).astype(jnp.float32)
    h1big = jnp.zeros((N, NC), jnp.float32)              # h1 on Er_p^2 and Ei_p^2
    for p in range(N):
        h1big = h1big.at[p, p * M:(p + 1) * M].set(h1)
        h1big = h1big.at[p, NM + p * M:NM + (p + 1) * M].set(h1)
    h2row = h2[None, :]                                  # [1, M]

    cb = params["conv_b"]                                # [N] complex
    cb_p = jnp.concatenate([jnp.real(cb), jnp.imag(cb)])[:, None].astype(jnp.float32)

    kernel = functools.partial(_ampbc_conv_kernel, Nmodes=N, M=M, nSp=nSp,
                               C00=float(params["C00"]))

    grid_spec = pltpu.PrefetchScalarGridSpec(
        num_scalar_prefetch=0,
        grid=(B_pad // b_tile,),
        in_specs=[
            pl.BlockSpec((2, b_tile), lambda b: (0, b)),          # sqrt(P), 1/sqrt(P)
            pl.BlockSpec((NC, b_tile), lambda b: (0, b)),         # packed raw field
            pl.BlockSpec((RG_pad, NC), lambda b: (0, 0)),         # gather+conv matrix
            pl.BlockSpec((2 * N, NB), lambda b: (0, 0)),          # IFWM weights (A)
            pl.BlockSpec((2 * N, NB), lambda b: (0, 0)),          # IFWM weights (B)
            pl.BlockSpec((N, NC), lambda b: (0, 0)),              # h1 filter matrix
            pl.BlockSpec((1, M), lambda b: (0, 0)),               # h2 filter row
            pl.BlockSpec((2 * N, 1), lambda b: (0, 0)),           # conv bias
        ],
        out_specs=pl.BlockSpec((2 * N, b_tile), lambda b: (0, b)),  # lane-dense slab
    )

    out = pl.pallas_call(
        kernel,
        out_shape=jax.ShapeDtypeStruct((2 * N, B_pad), jnp.float32),
        grid_spec=grid_spec,
        compiler_params=pltpu.CompilerParams(
            dimension_semantics=("parallel",),
            vmem_limit_bytes=32 * 1024 * 1024),
    )(scale, x_p, sel, wa, wb, h1big, h2row, cb_p)

    outc = (out[:N, :B] + 1j * out[N:2 * N, :B]).astype(jnp.complex64)
    return jnp.transpose(outc, (1, 0))                   # [B, Nmodes]


# ----------------------------------------------------------------------------
# Plain-JAX reference (same math, high-precision einsums) for correctness.
# ----------------------------------------------------------------------------
def reference_forward(x, task_info, params, *, M: int, rho: float):
    B, Lseq, Nmodes = x.shape
    L = M // 2
    c = Lseq // 2
    xw = x[:, c - L:c + L + 1, :]
    P = 10.0 ** (task_info[:, 0] / 10.0) / Nmodes
    sp = jnp.sqrt(P)
    E = xw * sp[:, None, None]
    Eroll = jnp.roll(E, 1, axis=-1)

    S = _triplet_index(M, rho)
    idx_m = np.array([L + m for m, n in S])
    idx_n = np.array([L + n for m, n in S])
    idx_mn = np.array([L + m + n for m, n in S])
    T = E[:, idx_m, :] * E[:, idx_n, :] * jnp.conj(E[:, idx_mn, :])     # [B, S, Nmodes]
    fwm = params["fwm_w"]
    Wm = fwm[np.minimum(np.arange(Nmodes), fwm.shape[0] - 1)]           # [Nmodes, S]
    E1 = jnp.einsum("bsp,ps->bp", T, Wm, precision="highest")

    power = jnp.abs(E) ** 2
    ps_ = 2.0 * power + jnp.roll(power, 1, axis=-1)
    h1 = params["xpm_h1"].at[L].set(0.0)
    h2 = params["xpm_h2"].at[L].set(0.0)
    zcv1 = jnp.einsum("bmp,m->bp", ps_, h1, precision="highest")
    phi = params["C00"] * power[:, L, :] + 2.0 * zcv1
    E2 = E[:, L, :] * jnp.exp(1j * phi)

    Ax = E * jnp.conj(Eroll)
    z2 = jnp.einsum("bmp,m->bp", Ax, h2.astype(Ax.dtype), precision="highest")
    E3 = 1j * z2 * Eroll[:, L, :]

    pbc = (E1 + E2 + E3) / sp[:, None]

    xT = jnp.transpose(x, (0, 2, 1))
    conv = (jnp.einsum("oim,bim->bo", params["conv_w"], xT, precision="highest")
            + params["conv_b"][None, :])
    return (pbc + conv).astype(jnp.complex64)


# ----------------------------------------------------------------------------
# Deterministic parameter init (module shapes; small random instead of zeros).
# ----------------------------------------------------------------------------
def init_params(key, M, rho, Nmodes, fwm_share=False):
    S = _triplet_index(M, rho)
    fwm_modes = 1 if fwm_share else 2
    ks = jax.random.split(key, 6)

    def cplx(k, shape, scale):
        kr, ki = jax.random.split(k)
        return (scale * jax.random.normal(kr, shape)
                + 1j * scale * jax.random.normal(ki, shape)).astype(jnp.complex64)

    return dict(
        C00=0.05,                                                  # scalar SPM coeff
        fwm_w=cplx(ks[0], (fwm_modes, len(S)), 0.02),              # IFWM weights
        xpm_h1=(0.02 * jax.random.normal(ks[1], (M,))).astype(jnp.float32),
        xpm_h2=(0.02 * jax.random.normal(ks[2], (M,))).astype(jnp.float32),
        conv_w=cplx(ks[3], (Nmodes, Nmodes, M), 0.05),             # ComplexConv1d weight
        conv_b=cplx(ks[4], (Nmodes,), 0.01),                       # ComplexConv1d bias
    )


if __name__ == "__main__":
    M, rho, Nmodes = 9, 1.0, 2
    key = jax.random.PRNGKey(0)
    kdata1, kdata2, kp = jax.random.split(key, 3)
    params = init_params(kp, M, rho, Nmodes)

    def make_inputs(k, B):
        kx, kxi = jax.random.split(k)
        x = (0.5 * (jax.random.normal(kx, (B, M, Nmodes))
                    + 1j * jax.random.normal(kxi, (B, M, Nmodes)))).astype(jnp.complex64)
        task_info = jnp.stack([
            jnp.linspace(-2.0, 1.0, B),       # launch power [dBm]
            jnp.full((B,), 193.1e12),         # Fi
            jnp.full((B,), 80e9),             # Fs
            jnp.full((B,), 1.0),              # Nch
        ], axis=1).astype(jnp.float32)
        return x, task_info

    # case 1: tiny batch -> single lane-dense grid step (B padded to 128 lanes)
    x, ti = make_inputs(kdata1, 4)
    out = jax.block_until_ready(eq_ampbc_add_conv(x, ti, params, M=M, rho=rho))
    ref = reference_forward(x, ti, params, M=M, rho=rho)
    assert out.shape == (4, Nmodes), out.shape
    assert jnp.allclose(out, ref, atol=2e-3, rtol=2e-3), float(jnp.abs(out - ref).max())

    # case 2: multi-step grid (B=130, b_tile=128 -> grid=(2,)) exercises tiling
    x2, ti2 = make_inputs(kdata2, 130)
    out2 = jax.block_until_ready(
        eq_ampbc_add_conv(x2, ti2, params, M=M, rho=rho, b_tile=128))
    ref2 = reference_forward(x2, ti2, params, M=M, rho=rho)
    assert out2.shape == (130, Nmodes), out2.shape
    assert jnp.allclose(out2, ref2, atol=2e-3, rtol=2e-3), float(jnp.abs(out2 - ref2).max())

    print("KERNEL_OK")
</pallas_src>

<mosaic_0001>
module attributes {stable_mosaic.version = 11 : i64} {
  func.func @_ampbc_conv_kernel(%arg0: i32, %arg1: memref<2x128xf32, #tpu.memory_space<vmem>>, %arg2: memref<36x128xf32, #tpu.memory_space<vmem>>, %arg3: memref<392x36xf32, #tpu.memory_space<vmem>>, %arg4: memref<4x64xf32, #tpu.memory_space<vmem>>, %arg5: memref<4x64xf32, #tpu.memory_space<vmem>>, %arg6: memref<2x36xf32, #tpu.memory_space<vmem>>, %arg7: memref<1x9xf32, #tpu.memory_space<vmem>>, %arg8: memref<4x1xf32, #tpu.memory_space<vmem>>, %arg9: memref<4x128xf32, #tpu.memory_space<vmem>>) attributes {dimension_semantics = [#tpu.dimension_semantics<parallel>], iteration_bounds = array<i64: 1>, scalar_prefetch = 0 : i64, scratch_operands = 0 : i64, tpu.core_type = #tpu.core_type<tc>, window_params = [{transform_indices = @transform_0, window_bounds = array<i64: 2, 128>}, {transform_indices = @transform_1, window_bounds = array<i64: 36, 128>}, {pipeline_mode = #tpu.pipeline_mode<synchronous>, transform_indices = @transform_2, window_bounds = array<i64: 392, 36>}, {pipeline_mode = #tpu.pipeline_mode<synchronous>, transform_indices = @transform_3, window_bounds = array<i64: 4, 64>}, {pipeline_mode = #tpu.pipeline_mode<synchronous>, transform_indices = @transform_4, window_bounds = array<i64: 4, 64>}, {pipeline_mode = #tpu.pipeline_mode<synchronous>, transform_indices = @transform_5, window_bounds = array<i64: 2, 36>}, {pipeline_mode = #tpu.pipeline_mode<synchronous>, transform_indices = @transform_6, window_bounds = array<i64: 1, 9>}, {pipeline_mode = #tpu.pipeline_mode<synchronous>, transform_indices = @transform_7, window_bounds = array<i64: 4, 1>}, {transform_indices = @transform_8, window_bounds = array<i64: 4, 128>}]} {
    %c0 = arith.constant 0 : index
    %c0_0 = arith.constant 0 : index
    %0 = vector.load %arg1[%c0, %c0_0] : memref<2x128xf32, #tpu.memory_space<vmem>>, vector<2x128xf32>
    %1 = vector.extract_strided_slice %0 {offsets = [0, 0], sizes = [1, 128], strides = [1, 1]} : vector<2x128xf32> to vector<1x128xf32>
    %2 = vector.extract_strided_slice %0 {offsets = [1, 0], sizes = [1, 128], strides = [1, 1]} : vector<2x128xf32> to vector<1x128xf32>
    %c0_1 = arith.constant 0 : index
    %c0_2 = arith.constant 0 : index
    %3 = vector.load %arg2[%c0_1, %c0_2] : memref<36x128xf32, #tpu.memory_space<vmem>>, vector<36x128xf32>
    %4 = vector.broadcast %1 : vector<1x128xf32> to vector<36x128xf32>
    %5 = arith.mulf %3, %4 : vector<36x128xf32>
    %c0_3 = arith.constant 0 : index
    %c0_4 = arith.constant 0 : index
    %6 = vector.load %arg3[%c0_3, %c0_4] : memref<392x36xf32, #tpu.memory_space<vmem>>, vector<392x36xf32>
    %cst = arith.constant dense<0.000000e+00> : vector<392x128xf32>
    %7 = tpu.matmul %6, %5, %cst {dimension_numbers = #tpu.dot_dimension_numbers<[1], [0], [0], [1], [0, 0, 1, 1], [], []>} : vector<392x36xf32>, vector<36x128xf32>, vector<392x128xf32> -> vector<392x128xf32>
    %8 = vector.extract_strided_slice %7 {offsets = [0, 0], sizes = [64, 128], strides = [1, 1]} : vector<392x128xf32> to vector<64x128xf32>
    %9 = vector.extract_strided_slice %7 {offsets = [64, 0], sizes = [64, 128], strides = [1, 1]} : vector<392x128xf32> to vector<64x128xf32>
    %10 = vector.extract_strided_slice %7 {offsets = [128, 0], sizes = [64, 128], strides = [1, 1]} : vector<392x128xf32> to vector<64x128xf32>
    %11 = vector.extract_strided_slice %7 {offsets = [192, 0], sizes = [64, 128], strides = [1, 1]} : vector<392x128xf32> to vector<64x128xf32>
    %12 = vector.extract_strided_slice %7 {offsets = [256, 0], sizes = [64, 128], strides = [1, 1]} : vector<392x128xf32> to vector<64x128xf32>
    %13 = vector.extract_strided_slice %7 {offsets = [320, 0], sizes = [64, 128], strides = [1, 1]} : vector<392x128xf32> to vector<64x128xf32>
    %14 = vector.extract_strided_slice %7 {offsets = [384, 0], sizes = [2, 128], strides = [1, 1]} : vector<392x128xf32> to vector<2x128xf32>
    %15 = vector.extract_strided_slice %7 {offsets = [386, 0], sizes = [2, 128], strides = [1, 1]} : vector<392x128xf32> to vector<2x128xf32>
    %16 = vector.extract_strided_slice %7 {offsets = [388, 0], sizes = [2, 128], strides = [1, 1]} : vector<392x128xf32> to vector<2x128xf32>
    %17 = vector.extract_strided_slice %7 {offsets = [390, 0], sizes = [2, 128], strides = [1, 1]} : vector<392x128xf32> to vector<2x128xf32>
    %18 = arith.mulf %8, %9 : vector<64x128xf32>
    %19 = arith.mulf %11, %12 : vector<64x128xf32>
    %20 = arith.subf %18, %19 : vector<64x128xf32>
    %21 = arith.mulf %8, %12 : vector<64x128xf32>
    %22 = arith.mulf %11, %9 : vector<64x128xf32>
    %23 = arith.addf %21, %22 : vector<64x128xf32>
    %24 = arith.mulf %20, %10 : vector<64x128xf32>
    %25 = arith.mulf %23, %13 : vector<64x128xf32>
    %26 = arith.addf %24, %25 : vector<64x128xf32>
    %27 = arith.mulf %23, %10 : vector<64x128xf32>
    %28 = arith.mulf %20, %13 : vector<64x128xf32>
    %29 = arith.subf %27, %28 : vector<64x128xf32>
    %c0_5 = arith.constant 0 : index
    %c0_6 = arith.constant 0 : index
    %30 = vector.load %arg4[%c0_5, %c0_6] : memref<4x64xf32, #tpu.memory_space<vmem>>, vector<4x64xf32>
    %cst_7 = arith.constant dense<0.000000e+00> : vector<4x128xf32>
    %31 = tpu.matmul %30, %26, %cst_7 {dimension_numbers = #tpu.dot_dimension_numbers<[1], [0], [0], [1], [0, 0, 1, 1], [], []>} : vector<4x64xf32>, vector<64x128xf32>, vector<4x128xf32> -> vector<4x128xf32>
    %c0_8 = arith.constant 0 : index
    %c0_9 = arith.constant 0 : index
    %32 = vector.load %arg5[%c0_8, %c0_9] : memref<4x64xf32, #tpu.memory_space<vmem>>, vector<4x64xf32>
    %cst_10 = arith.constant dense<0.000000e+00> : vector<4x128xf32>
    %33 = tpu.matmul %32, %29, %cst_10 {dimension_numbers = #tpu.dot_dimension_numbers<[1], [0], [0], [1], [0, 0, 1, 1], [], []>} : vector<4x64xf32>, vector<64x128xf32>, vector<4x128xf32> -> vector<4x128xf32>
    %34 = arith.addf %31, %33 : vector<4x128xf32>
    %35 = vector.extract_strided_slice %34 {offsets = [0, 0], sizes = [2, 128], strides = [1, 1]} : vector<4x128xf32> to vector<2x128xf32>
    %36 = vector.extract_strided_slice %34 {offsets = [2, 0], sizes = [2, 128], strides = [1, 1]} : vector<4x128xf32> to vector<2x128xf32>
    %37 = arith.mulf %5, %5 : vector<36x128xf32>
    %c0_11 = arith.constant 0 : index
    %c0_12 = arith.constant 0 : index
    %38 = vector.load %arg6[%c0_11, %c0_12] : memref<2x36xf32, #tpu.memory_space<vmem>>, vector<2x36xf32>
    %cst_13 = arith.constant dense<0.000000e+00> : vector<2x128xf32>
    %39 = tpu.matmul %38, %37, %cst_13 {dimension_numbers = #tpu.dot_dimension_numbers<[1], [0], [0], [1], [0, 0, 1, 1], [], []>} : vector<2x36xf32>, vector<36x128xf32>, vector<2x128xf32> -> vector<2x128xf32>
    %cst_14 = arith.constant 2.000000e+00 : f32
    %40 = vector.broadcast %cst_14 : f32 to vector<2x128xf32>
    %41 = arith.mulf %40, %39 : vector<2x128xf32>
    %42 = vector.extract_strided_slice %39 {offsets = [1, 0], sizes = [1, 128], strides = [1, 1]} : vector<2x128xf32> to vector<1x128xf32>
    %43 = vector.extract_strided_slice %39 {offsets = [0, 0], sizes = [1, 128], strides = [1, 1]} : vector<2x128xf32> to vector<1x128xf32>
    %44 = tpu.concatenate %42, %43 in 0 : vector<1x128xf32>, vector<1x128xf32> -> vector<2x128xf32>
    %45 = arith.addf %41, %44 : vector<2x128xf32>
    %46 = arith.mulf %14, %14 : vector<2x128xf32>
    %47 = arith.mulf %15, %15 : vector<2x128xf32>
    %48 = arith.addf %46, %47 : vector<2x128xf32>
    %cst_15 = arith.constant 5.000000e-02 : f32
    %49 = vector.broadcast %cst_15 : f32 to vector<2x128xf32>
    %50 = arith.mulf %49, %48 : vector<2x128xf32>
    %cst_16 = arith.constant 2.000000e+00 : f32
    %51 = vector.broadcast %cst_16 : f32 to vector<2x128xf32>
    %52 = arith.mulf %51, %45 : vector<2x128xf32>
    %53 = arith.addf %50, %52 : vector<2x128xf32>
    %54 = math.cos %53 : vector<2x128xf32>
    %55 = math.sin %53 : vector<2x128xf32>
    %56 = arith.mulf %14, %54 : vector<2x128xf32>
    %57 = arith.mulf %15, %55 : vector<2x128xf32>
    %58 = arith.subf %56, %57 : vector<2x128xf32>
    %59 = arith.mulf %14, %55 : vector<2x128xf32>
    %60 = arith.mulf %15, %54 : vector<2x128xf32>
    %61 = arith.addf %59, %60 : vector<2x128xf32>
    %62 = vector.extract_strided_slice %5 {offsets = [0, 0], sizes = [9, 128], strides = [1, 1]} : vector<36x128xf32> to vector<9x128xf32>
    %63 = vector.extract_strided_slice %5 {offsets = [18, 0], sizes = [9, 128], strides = [1, 1]} : vector<36x128xf32> to vector<9x128xf32>
    %64 = vector.extract_strided_slice %5 {offsets = [9, 0], sizes = [9, 128], strides = [1, 1]} : vector<36x128xf32> to vector<9x128xf32>
    %65 = vector.extract_strided_slice %5 {offsets = [27, 0], sizes = [9, 128], strides = [1, 1]} : vector<36x128xf32> to vector<9x128xf32>
    %66 = arith.mulf %62, %64 : vector<9x128xf32>
    %67 = arith.mulf %63, %65 : vector<9x128xf32>
    %68 = arith.addf %66, %67 : vector<9x128xf32>
    %69 = arith.mulf %63, %64 : vector<9x128xf32>
    %70 = arith.mulf %62, %65 : vector<9x128xf32>
    %71 = arith.subf %69, %70 : vector<9x128xf32>
    %c0_17 = arith.constant 0 : index
    %c0_18 = arith.constant 0 : index
    %72 = vector.load %arg7[%c0_17, %c0_18] : memref<1x9xf32, #tpu.memory_space<vmem>>, vector<1x9xf32>
    %cst_19 = arith.constant dense<0.000000e+00> : vector<1x128xf32>
    %73 = tpu.matmul %72, %68, %cst_19 {dimension_numbers = #tpu.dot_dimension_numbers<[1], [0], [0], [1], [0, 0, 1, 1], [], []>} : vector<1x9xf32>, vector<9x128xf32>, vector<1x128xf32> -> vector<1x128xf32>
    %c0_20 = arith.constant 0 : index
    %c0_21 = arith.constant 0 : index
    %74 = vector.load %arg7[%c0_20, %c0_21] : memref<1x9xf32, #tpu.memory_space<vmem>>, vector<1x9xf32>
    %cst_22 = arith.constant dense<0.000000e+00> : vector<1x128xf32>
    %75 = tpu.matmul %74, %71, %cst_22 {dimension_numbers = #tpu.dot_dimension_numbers<[1], [0], [0], [1], [0, 0, 1, 1], [], []>} : vector<1x9xf32>, vector<9x128xf32>, vector<1x128xf32> -> vector<1x128xf32>
    %76 = tpu.concatenate %73, %73 in 0 : vector<1x128xf32>, vector<1x128xf32> -> vector<2x128xf32>
    %cst_23 = arith.constant 0.000000e+00 : f32
    %77 = vector.broadcast %cst_23 : f32 to vector<1x128xf32>
    %78 = arith.subf %77, %75 : vector<1x128xf32>
    %79 = tpu.concatenate %75, %78 in 0 : vector<1x128xf32>, vector<1x128xf32> -> vector<2x128xf32>
    %80 = vector.extract_strided_slice %14 {offsets = [1, 0], sizes = [1, 128], strides = [1, 1]} : vector<2x128xf32> to vector<1x128xf32>
    %81 = vector.extract_strided_slice %14 {offsets = [0, 0], sizes = [1, 128], strides = [1, 1]} : vector<2x128xf32> to vector<1x128xf32>
    %82 = tpu.concatenate %80, %81 in 0 : vector<1x128xf32>, vector<1x128xf32> -> vector<2x128xf32>
    %83 = vector.extract_strided_slice %15 {offsets = [1, 0], sizes = [1, 128], strides = [1, 1]} : vector<2x128xf32> to vector<1x128xf32>
    %84 = vector.extract_strided_slice %15 {offsets = [0, 0], sizes = [1, 128], strides = [1, 1]} : vector<2x128xf32> to vector<1x128xf32>
    %85 = tpu.concatenate %83, %84 in 0 : vector<1x128xf32>, vector<1x128xf32> -> vector<2x128xf32>
    %86 = arith.mulf %76, %82 : vector<2x128xf32>
    %87 = arith.mulf %79, %85 : vector<2x128xf32>
    %88 = arith.subf %86, %87 : vector<2x128xf32>
    %89 = arith.mulf %76, %85 : vector<2x128xf32>
    %90 = arith.mulf %79, %82 : vector<2x128xf32>
    %91 = arith.addf %89, %90 : vector<2x128xf32>
    %cst_24 = arith.constant 0.000000e+00 : f32
    %92 = vector.broadcast %cst_24 : f32 to vector<2x128xf32>
    %93 = arith.subf %92, %91 : vector<2x128xf32>
    %c0_25 = arith.constant 0 : index
    %c0_26 = arith.constant 0 : index
    %94 = vector.load %arg8[%c0_25, %c0_26] : memref<4x1xf32, #tpu.memory_space<vmem>>, vector<4x1xf32>
    %95 = arith.addf %35, %58 : vector<2x128xf32>
    %96 = arith.addf %95, %93 : vector<2x128xf32>
    %97 = arith.addf %96, %16 : vector<2x128xf32>
    %98 = vector.broadcast %2 : vector<1x128xf32> to vector<2x128xf32>
    %99 = arith.mulf %97, %98 : vector<2x128xf32>
    %100 = vector.extract_strided_slice %94 {offsets = [0, 0], sizes = [2, 1], strides = [1, 1]} : vector<4x1xf32> to vector<2x1xf32>
    %101 = vector.broadcast %100 : vector<2x1xf32> to vector<2x128xf32>
    %102 = arith.addf %99, %101 : vector<2x128xf32>
    %103 = arith.addf %36, %61 : vector<2x128xf32>
    %104 = arith.addf %103, %88 : vector<2x128xf32>
    %105 = arith.addf %104, %17 : vector<2x128xf32>
    %106 = vector.broadcast %2 : vector<1x128xf32> to vector<2x128xf32>
    %107 = arith.mulf %105, %106 : vector<2x128xf32>
    %108 = vector.extract_strided_slice %94 {offsets = [2, 0], sizes = [2, 1], strides = [1, 1]} : vector<4x1xf32> to vector<2x1xf32>
    %109 = vector.broadcast %108 : vector<2x1xf32> to vector<2x128xf32>
    %110 = arith.addf %107, %109 : vector<2x128xf32>
    %111 = tpu.concatenate %102, %110 in 0 : vector<2x128xf32>, vector<2x128xf32> -> vector<4x128xf32>
    %c0_27 = arith.constant 0 : index
    %c0_28 = arith.constant 0 : index
    %112 = vector.load %arg9[%c0_27, %c0_28] : memref<4x128xf32, #tpu.memory_space<vmem>>, vector<4x128xf32>
    tpu.vector_store %arg9[%c0_27, %c0_28], %111 {strides = array<i32>} : memref<4x128xf32, #tpu.memory_space<vmem>>, vector<4x128xf32>,
    return
  }
  func.func @transform_0(%arg0: i32) -> (i32, i32) {
    %c0_i32 = arith.constant 0 : i32
    %c0_i32_0 = arith.constant 0 : i32
    return %c0_i32, %arg0 : i32, i32
  }
  func.func @transform_1(%arg0: i32) -> (i32, i32) {
    %c0_i32 = arith.constant 0 : i32
    %c0_i32_0 = arith.constant 0 : i32
    return %c0_i32, %arg0 : i32, i32
  }
  func.func @transform_2(%arg0: i32) -> (i32, i32) {
    %c0_i32 = arith.constant 0 : i32
    %c0_i32_0 = arith.constant 0 : i32
    %c0_i32_1 = arith.constant 0 : i32
    return %c0_i32, %c0_i32_0 : i32, i32
  }
  func.func @transform_3(%arg0: i32) -> (i32, i32) {
    %c0_i32 = arith.constant 0 : i32
    %c0_i32_0 = arith.constant 0 : i32
    %c0_i32_1 = arith.constant 0 : i32
    return %c0_i32, %c0_i32_0 : i32, i32
  }
  func.func @transform_4(%arg0: i32) -> (i32, i32) {
    %c0_i32 = arith.constant 0 : i32
    %c0_i32_0 = arith.constant 0 : i32
    %c0_i32_1 = arith.constant 0 : i32
    return %c0_i32, %c0_i32_0 : i32, i32
  }
  func.func @transform_5(%arg0: i32) -> (i32, i32) {
    %c0_i32 = arith.constant 0 : i32
    %c0_i32_0 = arith.constant 0 : i32
    %c0_i32_1 = arith.constant 0 : i32
    return %c0_i32, %c0_i32_0 : i32, i32
  }
  func.func @transform_6(%arg0: i32) -> (i32, i32) {
    %c0_i32 = arith.constant 0 : i32
    %c0_i32_0 = arith.constant 0 : i32
    %c0_i32_1 = arith.constant 0 : i32
    return %c0_i32, %c0_i32_0 : i32, i32
  }
  func.func @transform_7(%arg0: i32) -> (i32, i32) {
    %c0_i32 = arith.constant 0 : i32
    %c0_i32_0 = arith.constant 0 : i32
    %c0_i32_1 = arith.constant 0 : i32
    return %c0_i32, %c0_i32_0 : i32, i32
  }
  func.func @transform_8(%arg0: i32) -> (i32, i32) {
    %c0_i32 = arith.constant 0 : i32
    %c0_i32_0 = arith.constant 0 : i32
    return %c0_i32, %arg0 : i32, i32
  }
}

</mosaic_0001>

<llo_original>
// kernel: tpu_custom_call.1
$region0: #{tpu_custom_call.1}
  #allocation0 [shape = 'u32[]', space=smem, size = 0x4, offset = 0x4, fixed_abs, tag = 'smem constant byte address 0x4 - core index']
  #allocation1 [shape = 'u32[72,128]{1,0:T(1,128)}', space=vmem, size = 0x9000, scoped, tag = 'internal scratch']
  %s0 = inlined_call_operand.vmem [shape: f32[2,128], index: 0, kind: input, shape index: {}]
  %s1 = inlined_call_operand.vmem [shape: f32[36,128], index: 1, kind: input, shape index: {}]
  %s2 = inlined_call_operand.vmem [shape: f32[392,36], index: 2, kind: input, shape index: {}]
  %s3 = inlined_call_operand.vmem [shape: f32[4,64], index: 3, kind: input, shape index: {}]
  %s4 = inlined_call_operand.vmem [shape: f32[4,64], index: 4, kind: input, shape index: {}]
  %s5 = inlined_call_operand.vmem [shape: f32[2,36], index: 5, kind: input, shape index: {}]
  %s6 = inlined_call_operand.vmem [shape: f32[1,9], index: 6, kind: input, shape index: {}]
  %s7 = inlined_call_operand.vmem [shape: f32[4,1], index: 7, kind: input, shape index: {}]
  %s8 = inlined_call_operand.hbm [shape: f32[4,128], index: 8, kind: output, shape index: {}]
  %s9 = sld [smem:[#allocation0]]
  $region42: #{tpu_custom_call.1} parent=0
    _
  %s11 = ssub.s32 1, %s9
  %s12 = scalar_select 0, %s11, %s9
  $region1: #{tpu_custom_call.1} parent=0
    #allocation2 [shape = 'u8[2048]{0}', space=vmem, size = 0x800, scoped, tag = 'output window, operand 0, single buffered']
    #allocation3 [shape = 's32[1]{0}', space=sflag, size = 0x4, scoped, tag = 'scoped memory for tpu_custom_call.1']
    %13 = vsyncpa [#allocation3], 0
    // Predicated region
    $region2: #{tpu_custom_call.1} parent=1 // pred_check
      _
    $region3: #{tpu_custom_call.1} parent=1 // pred_check_branch
      %15 = sbr.rel (0) target = $region5
    $region4: #{tpu_custom_call.1} parent=1 // pred_region
      _
    $region5: #{tpu_custom_call.1} parent=1 // pred_fallthru
      _
    // Predicated region
    $region6: #{tpu_custom_call.1} parent=1 // pred_check
      _
    $region7: #{tpu_custom_call.1} parent=1 // pred_check_branch
      %17 = sbr.rel (0) target = $region9
    $region8: #{tpu_custom_call.1} parent=1 // pred_region
      _
    $region9: #{tpu_custom_call.1} parent=1 // pred_fallthru
      _
    // Predicated region
    $region10: #{tpu_custom_call.1} parent=1 // pred_check
      _
    $region11: #{tpu_custom_call.1} parent=1 // pred_check_branch
      %19 = sbr.rel (0) target = $region13
    $region12: #{tpu_custom_call.1} parent=1 // pred_region
      _
    $region13: #{tpu_custom_call.1} parent=1 // pred_fallthru
      _
    // Predicated region
    $region14: #{tpu_custom_call.1} parent=1 // pred_check
      _
    $region15: #{tpu_custom_call.1} parent=1 // pred_check_branch
      %21 = sbr.rel (0) target = $region17
    $region16: #{tpu_custom_call.1} parent=1 // pred_region
      _
    $region17: #{tpu_custom_call.1} parent=1 // pred_fallthru
      _
    // Predicated region
    $region18: #{tpu_custom_call.1} parent=1 // pred_check
      _
    $region19: #{tpu_custom_call.1} parent=1 // pred_check_branch
      %23 = sbr.rel (0) target = $region21
    $region20: #{tpu_custom_call.1} parent=1 // pred_region
      _
    $region21: #{tpu_custom_call.1} parent=1 // pred_fallthru
      _
    // Predicated region
    $region22: #{tpu_custom_call.1} parent=1 // pred_check
      _
    $region23: #{tpu_custom_call.1} parent=1 // pred_check_branch
      %25 = sbr.rel (0) target = $region25
    $region24: #{tpu_custom_call.1} parent=1 // pred_region
      _
    $region25: #{tpu_custom_call.1} parent=1 // pred_fallthru
      _
    // Predicated region
    $region26: #{tpu_custom_call.1} parent=1 // pred_check
      _
    $region27: #{tpu_custom_call.1} parent=1 // pred_check_branch
      %27 = sbr.rel (0) target = $region29
    $region28: #{tpu_custom_call.1} parent=1 // pred_region
      _
    $region29: #{tpu_custom_call.1} parent=1 // pred_fallthru
      _
    // Predicated region
    $region30: #{tpu_custom_call.1} parent=1 // pred_check
      _
    $region31: #{tpu_custom_call.1} parent=1 // pred_check_branch
      %29 = sbr.rel (0) target = $region33
    $region32: #{tpu_custom_call.1} parent=1 // pred_region
      _
    $region33: #{tpu_custom_call.1} parent=1 // pred_fallthru
      _
    %v30 = vld [vmem:[%s0] sm:$0x3]
    %v31 = vld [vmem:[%s1] sm:$0xff]
    %v32 = vld [vmem:[%s1 + $0x8] sm:$0xff]
    %v33 = vld [vmem:[%s1 + $0x10] sm:$0xff]
    %v34 = vld [vmem:[%s1 + $0x18] sm:$0xff]
    %v35 = vld [vmem:[%s1 + $0x20] sm:$0xf]
    %v36 = vperm.slane %v30, 0
    %v37 = vmul.f32 %v31, %v36
    %v38 = vmul.f32 %v32, %v36
    %v39 = vmul.f32 %v33, %v36
    %v40 = vmul.f32 %v34, %v36
    %v41 = vmul.f32 %v35, %v36
    %v42 = vld [vmem:[%s2] sm:$0xff]
    %v43 = vld [vmem:[%s2 + $0x8] sm:$0xff]
    %v44 = vld [vmem:[%s2 + $0x10] sm:$0xff]
    %v45 = vld [vmem:[%s2 + $0x18] sm:$0xff]
    %v46 = vld [vmem:[%s2 + $0x20] sm:$0xff]
    %v47 = vld [vmem:[%s2 + $0x28] sm:$0xff]
    %v48 = vld [vmem:[%s2 + $0x30] sm:$0xff]
    %v49 = vld [vmem:[%s2 + $0x38] sm:$0xff]
    %v50 = vld [vmem:[%s2 + $0x40] sm:$0xff]
    %v51 = vld [vmem:[%s2 + $0x48] sm:$0xff]
    %v52 = vld [vmem:[%s2 + $0x50] sm:$0xff]
    %v53 = vld [vmem:[%s2 + $0x58] sm:$0xff]
    %v54 = vld [vmem:[%s2 + $0x60] sm:$0xff]
    %v55 = vld [vmem:[%s2 + $0x68] sm:$0xff]
    %v56 = vld [vmem:[%s2 + $0x70] sm:$0xff]
    %v57 = vld [vmem:[%s2 + $0x78] sm:$0xff]
    %v58 = vld [vmem:[%s2 + $0x80] sm:$0xff]
    %v59 = vld [vmem:[%s2 + $0x88] sm:$0xff]
    %v60 = vld [vmem:[%s2 + $0x90] sm:$0xff]
    %v61 = vld [vmem:[%s2 + $0x98] sm:$0xff]
    %v62 = vld [vmem:[%s2 + $0xa0] sm:$0xff]
    %v63 = vld [vmem:[%s2 + $0xa8] sm:$0xff]
    %v64 = vld [vmem:[%s2 + $0xb0] sm:$0xff]
    %v65 = vld [vmem:[%s2 + $0xb8] sm:$0xff]
    %v66 = vld [vmem:[%s2 + $0xc0] sm:$0xff]
    %v67 = vld [vmem:[%s2 + $0xc8] sm:$0xff]
    %v68 = vld [vmem:[%s2 + $0xd0] sm:$0xff]
    %v69 = vld [vmem:[%s2 + $0xd8] sm:$0xff]
    %v70 = vld [vmem:[%s2 + $0xe0] sm:$0xff]
    %v71 = vld [vmem:[%s2 + $0xe8] sm:$0xff]
    %v72 = vld [vmem:[%s2 + $0xf0] sm:$0xff]
    %v73 = vld [vmem:[%s2 + $0xf8] sm:$0xff]
    %v74 = vld [vmem:[%s2 + $0x100] sm:$0xff]
    %v75 = vld [vmem:[%s2 + $0x108] sm:$0xff]
    %v76 = vld [vmem:[%s2 + $0x110] sm:$0xff]
    %v77 = vld [vmem:[%s2 + $0x118] sm:$0xff]
    %v78 = vld [vmem:[%s2 + $0x120] sm:$0xff]
    %v79 = vld [vmem:[%s2 + $0x128] sm:$0xff]
    %v80 = vld [vmem:[%s2 + $0x130] sm:$0xff]
    %v81 = vld [vmem:[%s2 + $0x138] sm:$0xff]
    %v82 = vld [vmem:[%s2 + $0x140] sm:$0xff]
    %v83 = vld [vmem:[%s2 + $0x148] sm:$0xff]
    %v84 = vld [vmem:[%s2 + $0x150] sm:$0xff]
    %v85 = vld [vmem:[%s2 + $0x158] sm:$0xff]
    %v86 = vld [vmem:[%s2 + $0x160] sm:$0xff]
    %v87 = vld [vmem:[%s2 + $0x168] sm:$0xff]
    %v88 = vld [vmem:[%s2 + $0x170] sm:$0xff]
    %v89 = vld [vmem:[%s2 + $0x178] sm:$0xff]
    %v90 = vld [vmem:[%s2 + $0x180] sm:$0xff]
    %vm91 = vcmask 293888
    %v93 = vsel %vm91, %v42, 0
    %v96 = vsel %vm91, %v43, 0
    %v99 = vsel %vm91, %v44, 0
    %v102 = vsel %vm91, %v45, 0
    %v105 = vsel %vm91, %v46, 0
    %v108 = vsel %vm91, %v47, 0
    %v111 = vsel %vm91, %v48, 0
    %v114 = vsel %vm91, %v49, 0
    %v117 = vsel %vm91, %v50, 0
    %v120 = vsel %vm91, %v51, 0
    %v123 = vsel %vm91, %v52, 0
    %v126 = vsel %vm91, %v53, 0
    %v129 = vsel %vm91, %v54, 0
    %v132 = vsel %vm91, %v55, 0
    %v135 = vsel %vm91, %v56, 0
    %v138 = vsel %vm91, %v57, 0
    %v141 = vsel %vm91, %v58, 0
    %v144 = vsel %vm91, %v59, 0
    %v147 = vsel %vm91, %v60, 0
    %v150 = vsel %vm91, %v61, 0
    %v153 = vsel %vm91, %v62, 0
    %v156 = vsel %vm91, %v63, 0
    %v159 = vsel %vm91, %v64, 0
    %v162 = vsel %vm91, %v65, 0
    %v165 = vsel %vm91, %v66, 0
    %v168 = vsel %vm91, %v67, 0
    %v171 = vsel %vm91, %v68, 0
    %v174 = vsel %vm91, %v69, 0
    %v177 = vsel %vm91, %v70, 0
    %v180 = vsel %vm91, %v71, 0
    %v183 = vsel %vm91, %v72, 0
    %v186 = vsel %vm91, %v73, 0
    %v189 = vsel %vm91, %v74, 0
    %v192 = vsel %vm91, %v75, 0
    %v195 = vsel %vm91, %v76, 0
    %v198 = vsel %vm91, %v77, 0
    %v201 = vsel %vm91, %v78, 0
    %v204 = vsel %vm91, %v79, 0
    %v207 = vsel %vm91, %v80, 0
    %v210 = vsel %vm91, %v81, 0
    %v213 = vsel %vm91, %v82, 0
    %v216 = vsel %vm91, %v83, 0
    %v219 = vsel %vm91, %v84, 0
    %v222 = vsel %vm91, %v85, 0
    %v225 = vsel %vm91, %v86, 0
    %v228 = vsel %vm91, %v87, 0
    %v231 = vsel %vm91, %v88, 0
    %v234 = vsel %vm91, %v89, 0
    %v237 = vsel %vm91, %v90, 0
    %vm239 = vcmask 1043456
    %v241 = vsel %vm239, %v41, 0
    %243 = vmatpush.msra.mxu0 0.0
    %244 = vmatpush.msra.mxu0 0.0
    %245 = vmatpush.msra.mxu0 0.0
    %246 = vmatpush.msra.mxu0 0.0
    %247 = vmatpush.msra.mxu0 0.0
    %248 = vmatpush.msra.mxu0 0.0
    %249 = vmatpush.msra.mxu0 0.0
    %250 = vmatpush.msra.mxu0 0.0
    %251 = vmatpush.msra.mxu0 0.0
    %252 = vmatpush.msra.mxu0 0.0
    %253 = vmatpush.msra.mxu0 0.0
    %254 = vmatpush.msra.mxu0 %v241
    %255 = vmatpush.msra.mxu0 %v40
    %256 = vmatpush.msra.mxu0 %v39
    %257 = vmatpush.msra.mxu0 %v38
    %258 = vmatpush.msra.mxu0 %v37
    %259 = vmatmul.f32.gmra.mxu0 %v93
    %v260 = vpop.f32.mrf.mxu0
    %v261 = vadd.f32 0.0, %v260
    %262 = vmatmul.f32.gmra.mxu0 %v96
    %v263 = vpop.f32.mrf.mxu0
    %v264 = vadd.f32 0.0, %v263
    %265 = vmatmul.f32.gmra.mxu0 %v99
    %v266 = vpop.f32.mrf.mxu0
    %v267 = vadd.f32 0.0, %v266
    %268 = vmatmul.f32.gmra.mxu0 %v102
    %v269 = vpop.f32.mrf.mxu0
    %v270 = vadd.f32 0.0, %v269
    %271 = vmatmul.f32.gmra.mxu0 %v105
    %v272 = vpop.f32.mrf.mxu0
    %v273 = vadd.f32 0.0, %v272
    %274 = vmatmul.f32.gmra.mxu0 %v108
    %v275 = vpop.f32.mrf.mxu0
    %v276 = vadd.f32 0.0, %v275
    %277 = vmatmul.f32.gmra.mxu0 %v111
    %v278 = vpop.f32.mrf.mxu0
    %v279 = vadd.f32 0.0, %v278
    %280 = vmatmul.f32.gmra.mxu0 %v114
    %v281 = vpop.f32.mrf.mxu0
    %v282 = vadd.f32 0.0, %v281
    %283 = vmatmul.f32.gmra.mxu0 %v117
    %v284 = vpop.f32.mrf.mxu0
    %v285 = vadd.f32 0.0, %v284
    %286 = vmatmul.f32.gmra.mxu0 %v120
    %v287 = vpop.f32.mrf.mxu0
    %v288 = vadd.f32 0.0, %v287
    %289 = vmatmul.f32.gmra.mxu0 %v123
    %v290 = vpop.f32.mrf.mxu0
    %v291 = vadd.f32 0.0, %v290
    %292 = vmatmul.f32.gmra.mxu0 %v126
    %v293 = vpop.f32.mrf.mxu0
    %v294 = vadd.f32 0.0, %v293
    %295 = vmatmul.f32.gmra.mxu0 %v129
    %v296 = vpop.f32.mrf.mxu0
    %v297 = vadd.f32 0.0, %v296
    %298 = vmatmul.f32.gmra.mxu0 %v132
    %v299 = vpop.f32.mrf.mxu0
    %v300 = vadd.f32 0.0, %v299
    %301 = vmatmul.f32.gmra.mxu0 %v135
    %v302 = vpop.f32.mrf.mxu0
    %v303 = vadd.f32 0.0, %v302
    %304 = vmatmul.f32.gmra.mxu0 %v138
    %v305 = vpop.f32.mrf.mxu0
    %v306 = vadd.f32 0.0, %v305
    %307 = vmatmul.f32.gmra.mxu0 %v141
    %v308 = vpop.f32.mrf.mxu0
    %v309 = vadd.f32 0.0, %v308
    %310 = vmatmul.f32.gmra.mxu0 %v144
    %v311 = vpop.f32.mrf.mxu0
    %v312 = vadd.f32 0.0, %v311
    %313 = vmatmul.f32.gmra.mxu0 %v147
    %v314 = vpop.f32.mrf.mxu0
    %v315 = vadd.f32 0.0, %v314
    %316 = vmatmul.f32.gmra.mxu0 %v150
    %v317 = vpop.f32.mrf.mxu0
    %v318 = vadd.f32 0.0, %v317
    %319 = vmatmul.f32.gmra.mxu0 %v153
    %v320 = vpop.f32.mrf.mxu0
    %v321 = vadd.f32 0.0, %v320
    %322 = vmatmul.f32.gmra.mxu0 %v156
    %v323 = vpop.f32.mrf.mxu0
    %v324 = vadd.f32 0.0, %v323
    %325 = vmatmul.f32.gmra.mxu0 %v159
    %v326 = vpop.f32.mrf.mxu0
    %v327 = vadd.f32 0.0, %v326
    %328 = vmatmul.f32.gmra.mxu0 %v162
    %v329 = vpop.f32.mrf.mxu0
    %v330 = vadd.f32 0.0, %v329
    %331 = vmatmul.f32.gmra.mxu0 %v165
    %v332 = vpop.f32.mrf.mxu0
    %v333 = vadd.f32 0.0, %v332
    %334 = vmatmul.f32.gmra.mxu0 %v168
    %v335 = vpop.f32.mrf.mxu0
    %v336 = vadd.f32 0.0, %v335
    %337 = vmatmul.f32.gmra.mxu0 %v171
    %v338 = vpop.f32.mrf.mxu0
    %v339 = vadd.f32 0.0, %v338
    %340 = vmatmul.f32.gmra.mxu0 %v174
    %v341 = vpop.f32.mrf.mxu0
    %v342 = vadd.f32 0.0, %v341
    %343 = vmatmul.f32.gmra.mxu0 %v177
    %v344 = vpop.f32.mrf.mxu0
    %v345 = vadd.f32 0.0, %v344
    %346 = vmatmul.f32.gmra.mxu0 %v180
    %v347 = vpop.f32.mrf.mxu0
    %v348 = vadd.f32 0.0, %v347
    %349 = vmatmul.f32.gmra.mxu0 %v183
    %v350 = vpop.f32.mrf.mxu0
    %v351 = vadd.f32 0.0, %v350
    %352 = vmatmul.f32.gmra.mxu0 %v186
    %v353 = vpop.f32.mrf.mxu0
    %v354 = vadd.f32 0.0, %v353
    %355 = vmatmul.f32.gmra.mxu0 %v189
    %v356 = vpop.f32.mrf.mxu0
    %v357 = vadd.f32 0.0, %v356
    %358 = vmatmul.f32.gmra.mxu0 %v192
    %v359 = vpop.f32.mrf.mxu0
    %v360 = vadd.f32 0.0, %v359
    %361 = vmatmul.f32.gmra.mxu0 %v195
    %v362 = vpop.f32.mrf.mxu0
    %v363 = vadd.f32 0.0, %v362
    %364 = vmatmul.f32.gmra.mxu0 %v198
    %v365 = vpop.f32.mrf.mxu0
    %v366 = vadd.f32 0.0, %v365
    %367 = vmatmul.f32.gmra.mxu0 %v201
    %v368 = vpop.f32.mrf.mxu0
    %v369 = vadd.f32 0.0, %v368
    %370 = vmatmul.f32.gmra.mxu0 %v204
    %v371 = vpop.f32.mrf.mxu0
    %v372 = vadd.f32 0.0, %v371
    %373 = vmatmul.f32.gmra.mxu0 %v207
    %v374 = vpop.f32.mrf.mxu0
    %v375 = vadd.f32 0.0, %v374
    %376 = vmatmul.f32.gmra.mxu0 %v210
    %v377 = vpop.f32.mrf.mxu0
    %v378 = vadd.f32 0.0, %v377
    %379 = vmatmul.f32.gmra.mxu0 %v213
    %v380 = vpop.f32.mrf.mxu0
    %v381 = vadd.f32 0.0, %v380
    %382 = vmatmul.f32.gmra.mxu0 %v216
    %v383 = vpop.f32.mrf.mxu0
    %v384 = vadd.f32 0.0, %v383
    %385 = vmatmul.f32.gmra.mxu0 %v219
    %v386 = vpop.f32.mrf.mxu0
    %v387 = vadd.f32 0.0, %v386
    %388 = vmatmul.f32.gmra.mxu0 %v222
    %v389 = vpop.f32.mrf.mxu0
    %v390 = vadd.f32 0.0, %v389
    %391 = vmatmul.f32.gmra.mxu0 %v225
    %v392 = vpop.f32.mrf.mxu0
    %v393 = vadd.f32 0.0, %v392
    %394 = vmatmul.f32.gmra.mxu0 %v228
    %v395 = vpop.f32.mrf.mxu0
    %v396 = vadd.f32 0.0, %v395
    %397 = vmatmul.f32.gmra.mxu0 %v231
    %v398 = vpop.f32.mrf.mxu0
    %v399 = vadd.f32 0.0, %v398
    %400 = vmatmul.f32.gmra.mxu0 %v234
    %v401 = vpop.f32.mrf.mxu0
    %v402 = vadd.f32 0.0, %v401
    %403 = vmatmul.f32.gmra.mxu0 %v237
    %v404 = vpop.f32.mrf.mxu0
    %v405 = vadd.f32 0.0, %v404
    %406 = vdwg.mxu0
    %v407 = vmul.f32 %v261, %v285
    %v408 = vmul.f32 %v264, %v288
    %v409 = vmul.f32 %v267, %v291
    %v410 = vmul.f32 %v270, %v294
    %v411 = vmul.f32 %v273, %v297
    %v412 = vmul.f32 %v276, %v300
    %v413 = vmul.f32 %v279, %v303
    %v414 = vmul.f32 %v282, %v306
    %v415 = vmul.f32 %v333, %v357
    %v416 = vmul.f32 %v336, %v360
    %v417 = vmul.f32 %v339, %v363
    %v418 = vmul.f32 %v342, %v366
    %v419 = vmul.f32 %v345, %v369
    %v420 = vmul.f32 %v348, %v372
    %v421 = vmul.f32 %v351, %v375
    %v422 = vmul.f32 %v354, %v378
    %v423 = vsub.f32 %v407, %v415
    %v424 = vsub.f32 %v408, %v416
    %v425 = vsub.f32 %v409, %v417
    %v426 = vsub.f32 %v410, %v418
    %v427 = vsub.f32 %v411, %v419
    %v428 = vsub.f32 %v412, %v420
    %v429 = vsub.f32 %v413, %v421
    %v430 = vsub.f32 %v414, %v422
    %v431 = vmul.f32 %v261, %v357
    %v432 = vmul.f32 %v264, %v360
    %v433 = vmul.f32 %v267, %v363
    %v434 = vmul.f32 %v270, %v366
    %v435 = vmul.f32 %v273, %v369
    %v436 = vmul.f32 %v276, %v372
    %v437 = vmul.f32 %v279, %v375
    %v438 = vmul.f32 %v282, %v378
    %v439 = vmul.f32 %v333, %v285
    %v440 = vmul.f32 %v336, %v288
    %v441 = vmul.f32 %v339, %v291
    %v442 = vmul.f32 %v342, %v294
    %v443 = vmul.f32 %v345, %v297
    %v444 = vmul.f32 %v348, %v300
    %v445 = vmul.f32 %v351, %v303
    %v446 = vmul.f32 %v354, %v306
    %v447 = vadd.f32 %v431, %v439
    %v448 = vadd.f32 %v432, %v440
    %v449 = vadd.f32 %v433, %v441
    %v450 = vadd.f32 %v434, %v442
    %v451 = vadd.f32 %v435, %v443
    %v452 = vadd.f32 %v436, %v444
    %v453 = vadd.f32 %v437, %v445
    %v454 = vadd.f32 %v438, %v446
    %v455 = vmul.f32 %v423, %v309
    %v456 = vmul.f32 %v424, %v312
    %v457 = vmul.f32 %v425, %v315
    %v458 = vmul.f32 %v426, %v318
    %v459 = vmul.f32 %v427, %v321
    %v460 = vmul.f32 %v428, %v324
    %v461 = vmul.f32 %v429, %v327
    %v462 = vmul.f32 %v430, %v330
    %v463 = vmul.f32 %v447, %v381
    %v464 = vmul.f32 %v448, %v384
    %v465 = vmul.f32 %v449, %v387
    %v466 = vmul.f32 %v450, %v390
    %v467 = vmul.f32 %v451, %v393
    %v468 = vmul.f32 %v452, %v396
    %v469 = vmul.f32 %v453, %v399
    %v470 = vmul.f32 %v454, %v402
    %v471 = vadd.f32 %v455, %v463
    %v472 = vadd.f32 %v456, %v464
    %v473 = vadd.f32 %v457, %v465
    %v474 = vadd.f32 %v458, %v466
    %v475 = vadd.f32 %v459, %v467
    %v476 = vadd.f32 %v460, %v468
    %v477 = vadd.f32 %v461, %v469
    %v478 = vadd.f32 %v462, %v470
    %v479 = vmul.f32 %v447, %v309
    %v480 = vmul.f32 %v448, %v312
    %v481 = vmul.f32 %v449, %v315
    %v482 = vmul.f32 %v450, %v318
    %v483 = vmul.f32 %v451, %v321
    %v484 = vmul.f32 %v452, %v324
    %v485 = vmul.f32 %v453, %v327
    %v486 = vmul.f32 %v454, %v330
    %v487 = vmul.f32 %v423, %v381
    %v488 = vmul.f32 %v424, %v384
    %v489 = vmul.f32 %v425, %v387
    %v490 = vmul.f32 %v426, %v390
    %v491 = vmul.f32 %v427, %v393
    %v492 = vmul.f32 %v428, %v396
    %v493 = vmul.f32 %v429, %v399
    %v494 = vmul.f32 %v430, %v402
    %v495 = vsub.f32 %v479, %v487
    %v496 = vsub.f32 %v480, %v488
    %v497 = vsub.f32 %v481, %v489
    %v498 = vsub.f32 %v482, %v490
    %v499 = vsub.f32 %v483, %v491
    %v500 = vsub.f32 %v484, %v492
    %v501 = vsub.f32 %v485, %v493
    %v502 = vsub.f32 %v486, %v494
    %v503 = vld [vmem:[%s3] sm:$0xf]
    %v504 = vld [vmem:[%s4] sm:$0xf]
    %vm505 = vcmask 523264
    %v507 = vsel %vm505, %v504, 0
    %509 = vmatpush.msra.mxu0 0.0
    %510 = vmatpush.msra.mxu0 0.0
    %511 = vmatpush.msra.mxu0 0.0
    %512 = vmatpush.msra.mxu0 0.0
    %513 = vmatpush.msra.mxu0 0.0
    %514 = vmatpush.msra.mxu0 0.0
    %515 = vmatpush.msra.mxu0 0.0
    %516 = vmatpush.msra.mxu0 0.0
    %517 = vmatpush.msra.mxu0 %v502
    %518 = vmatpush.msra.mxu0 %v501
    %519 = vmatpush.msra.mxu0 %v500
    %520 = vmatpush.msra.mxu0 %v499
    %521 = vmatpush.msra.mxu0 %v498
    %522 = vmatpush.msra.mxu0 %v497
    %523 = vmatpush.msra.mxu0 %v496
    %524 = vmatpush.msra.mxu0 %v495
    %525 = vmatmul.f32.gmra.mxu0 %v507
    %v526 = vpop.f32.mrf.mxu0
    %v527 = vadd.f32 0.0, %v526
    %528 = vdwg.mxu0
    %v530 = vsel %vm505, %v503, 0
    %532 = vmatpush.msra.mxu0 0.0
    %533 = vmatpush.msra.mxu0 0.0
    %534 = vmatpush.msra.mxu0 0.0
    %535 = vmatpush.msra.mxu0 0.0
    %536 = vmatpush.msra.mxu0 0.0
    %537 = vmatpush.msra.mxu0 0.0
    %538 = vmatpush.msra.mxu0 0.0
    %539 = vmatpush.msra.mxu0 0.0
    %540 = vmatpush.msra.mxu0 %v478
    %541 = vmatpush.msra.mxu0 %v477
    %542 = vmatpush.msra.mxu0 %v476
    %543 = vmatpush.msra.mxu0 %v475
    %544 = vmatpush.msra.mxu0 %v474
    %545 = vmatpush.msra.mxu0 %v473
    %546 = vmatpush.msra.mxu0 %v472
    %547 = vmatpush.msra.mxu0 %v471
    %548 = vmatmul.f32.gmra.mxu0 %v530
    %v549 = vpop.f32.mrf.mxu0
    %v550 = vadd.f32 %v527, %v549
    %551 = vdwg.mxu0
    %v552 = vmul.f32 %v37, %v37
    %v553 = vmul.f32 %v38, %v38
    %v554 = vmul.f32 %v39, %v39
    %v555 = vmul.f32 %v40, %v40
    %v556 = vmul.f32 %v41, %v41
    %v557 = vld [vmem:[%s5] sm:$0x3]
    %v559 = vsel %vm91, %v557, 0
    %v562 = vsel %vm239, %v556, 0
    %564 = vmatpush.msra.mxu0 0.0
    %565 = vmatpush.msra.mxu0 0.0
    %566 = vmatpush.msra.mxu0 0.0
    %567 = vmatpush.msra.mxu0 0.0
    %568 = vmatpush.msra.mxu0 0.0
    %569 = vmatpush.msra.mxu0 0.0
    %570 = vmatpush.msra.mxu0 0.0
    %571 = vmatpush.msra.mxu0 0.0
    %572 = vmatpush.msra.mxu0 0.0
    %573 = vmatpush.msra.mxu0 0.0
    %574 = vmatpush.msra.mxu0 0.0
    %575 = vmatpush.msra.mxu0 %v562
    %576 = vmatpush.msra.mxu0 %v555
    %577 = vmatpush.msra.mxu0 %v554
    %578 = vmatpush.msra.mxu0 %v553
    %579 = vmatpush.msra.mxu0 %v552
    %580 = vmatmul.f32.gmra.mxu0 %v559
    %v581 = vpop.f32.mrf.mxu0
    %v582 = vadd.f32 0.0, %v581
    %583 = vdwg.mxu0
    %v584 = vmul.f32 %v582, 2.0
    %v586 = vrot.slane %v582, 1
    %v588 = vrot.slane %v582, 7
    %vm590 = vcmask 1040384
    %v591 = vsel %vm590, %v586, %v588
    %v592 = vadd.f32 %v584, %v591
    %v593 = vmul.f32 %v405, %v405
    %v595 = vrot.slane %v593, 2
    %v597 = vadd.f32 %v593, %v595
    %v598 = vmul.f32 %v597, 0.05
    %v599 = vmul.f32 %v592, 2.0
    %v600 = vadd.f32 %v598, %v599
    %v601 = vand.u32 2147483647, %v600
    %vm602 = vcmp.le.f32.partialorder %v601, 0.7853982
    %vm603 = vcmp.lt.s32.totalorder %v600, 0
    %v604 = vand.u32 %v600, 2139095040
    %v605 = vshrl.u32 %v604, 23
    %v606 = vsub.s32 %v605, 127
    %v607 = vand.u32 2147483647, %v600
    %v608 = vand.u32 %v607, 8388607
    %v609 = vor.u32 %v608, 8388608
    %v610 = vsub.s32 0, %v609
    %v611 = vadd.s32 %v606, 1
    %vm612 = vcmp.gt.s32.totalorder %v611, 0
    %v613 = vsel %vm612, %v611, 0
    %v614 = vshrl.u32 %v613, 5
    %v615 = vand.u32 %v613, 31
    %v616 = vsub.s32 32, %v615
    %v617 = vshrl.u32 683565275, %v616
    %v618 = vshll.u32 683565275, %v615
    %v619 = vshrl.u32 2475754826, %v616
    %v620 = vor.u32 %v618, %v619
    %v621 = vshll.u32 2475754826, %v615
    %v622 = vshrl.u32 2131351028, %v616
    %v623 = vor.u32 %v621, %v622
    %v624 = vshll.u32 2131351028, %v615
    %v625 = vshrl.u32 2102212464, %v616
    %v626 = vor.u32 %v624, %v625
    %v627 = vshll.u32 2102212464, %v615
    %v628 = vshrl.u32 920167782, %v616
    %v629 = vor.u32 %v627, %v628
    %v630 = vshll.u32 920167782, %v615
    %v631 = vshrl.u32 1326507024, %v616
    %v632 = vor.u32 %v630, %v631
    %vm633 = vcmp.lt.s32.totalorder %v614, 1
    %vm634 = vcmp.lt.s32.totalorder %v614, 2
    %vm635 = vcmp.lt.s32.totalorder %v614, 3
    %vm636 = vcmp.lt.s32.totalorder %v614, 4
    %v637 = vsel %vm633, %v617, %v620
    %v638 = vsel %vm636, %v626, 2102212464
    %v639 = vsel %vm635, %v623, %v638
    %v640 = vsel %vm634, %v637, %v639
    %v641 = vsel %vm633, %v620, %v623
    %v642 = vsel %vm636, %v629, 920167782
    %v643 = vsel %vm635, %v626, %v642
    %v644 = vsel %vm634, %v641, %v643
    %v645 = vsel %vm633, %v623, %v626
    %v646 = vsel %vm636, %v632, 1326507024
    %v647 = vsel %vm635, %v629, %v646
    %v648 = vsel %vm634, %v645, %v647
    %v649 = vshll.u32 %v609, 8
    %v650 = vand.u32 %v649, 65535
    %v651 = vshrl.u32 %v649, 16
    %v652 = vand.u32 %v648, 65535
    %v653 = vshrl.u32 %v648, 16
    %v654 = vmul.u32 %v650, %v652
    %v655 = vmul.u32 %v650, %v653
    %v656 = vmul.u32 %v651, %v652
    %v657 = vmul.u32 %v651, %v653
    %v658 = vshll.u32 %v655, 16
    %v659 = vshrl.u32 %v655, 16
    %v660 = vshll.u32 %v656, 16
    %v661 = vshrl.u32 %v656, 16
    %vm662 = vc.u32 %v654, %v658
    %v663 = vsel %vm662, 1, 0
    %v664 = vadd.s32 %v654, %v658
    %v665 = vadd.s32 %v657, %v663
    %vm666 = vc.u32 %v664, %v660
    %v667 = vsel %vm666, 1, 0
    %v668 = vadd.s32 %v664, %v660
    %v669 = vadd.s32 %v665, %v667
    %v670 = vadd.s32 %v669, %v659
    %v671 = vadd.s32 %v670, %v661
    %v672 = vand.u32 %v649, 65535
    %v673 = vshrl.u32 %v649, 16
    %v674 = vand.u32 %v644, 65535
    %v675 = vshrl.u32 %v644, 16
    %v676 = vmul.u32 %v672, %v674
    %v677 = vmul.u32 %v672, %v675
    %v678 = vmul.u32 %v673, %v674
    %v679 = vmul.u32 %v673, %v675
    %v680 = vshll.u32 %v677, 16
    %v681 = vshrl.u32 %v677, 16
    %v682 = vshll.u32 %v678, 16
    %v683 = vshrl.u32 %v678, 16
    %vm684 = vc.u32 %v676, %v680
    %v685 = vsel %vm684, 1, 0
    %v686 = vadd.s32 %v676, %v680
    %v687 = vadd.s32 %v679, %v685
    %vm688 = vc.u32 %v686, %v682
    %v689 = vsel %vm688, 1, 0
    %v690 = vadd.s32 %v686, %v682
    %v691 = vadd.s32 %v687, %v689
    %v692 = vadd.s32 %v691, %v681
    %v693 = vadd.s32 %v692, %v683
    %v694 = vmul.u32 %v649, %v640
    %v695 = vadd.s32 %v671, %v690
    %vm696 = vc.u32 %v671, %v690
    %v697 = vadd.s32 %v693, 1
    %v698 = vsel %vm696, %v697, %v693
    %v699 = vadd.s32 %v694, %v698
    %v700 = vadd.s32 %v699, 536870912
    %v701 = vshrl.u32 %v700, 30
    %v702 = vshll.u32 %v701, 30
    %v703 = vsub.s32 %v699, %v702
    %vm704 = vcmp.lt.s32.totalorder %v703, 0
    %v705 = vsub.s32 0, %v703
    %v706 = vsel %vm704, %v705, %v703
    %v707 = vclz %v706
    %v708 = vsub.s32 %v707, 2
    %vm709 = vcmp.gt.s32.totalorder 0, %v708
    %v710 = vsel %vm709, 0, %v708
    %v711 = vsub.s32 32, %v710
    %v712 = vshll.u32 %v703, %v710
    %v713 = vshrl.u32 %v695, %v711
    %v714 = vor.u32 %v712, %v713
    %v715 = vsub.s32 4294967266, %v710
    %v716 = vadd.s32 %v715, 127
    %v717 = vshll.u32 %v716, 23
    %v718 = vor.u32 4788187, %v717
    %v719 = vand.u32 2147483647, %v718
    %v721 = vcvt.s32.f32 %v714
    %v722 = vmul.f32 %v721, %v719
    %v723 = vxor.u32 %v722, 2147483648
    %v724 = vsel %vm603, %v723, %v722
    %v725 = vsub.s32 4, %v701
    %v726 = vsel %vm603, %v725, %v701
    %v727 = vsel %vm602, %v600, %v724
    %v728 = vsel %vm602, 0, %v726
    %v729 = vmul.f32 %v727, %v727
    %v730 = vmul.f32 %v729, -0.001358992
    %v731 = vadd.f32 %v730, 0.041655596
    %v732 = vmul.f32 %v729, %v731
    %v733 = vadd.f32 %v732, -0.4999988
    %v734 = vmul.f32 %v729, %v733
    %v735 = vadd.f32 1.0, %v734
    %v736 = vmul.f32 %v727, %v727
    %v737 = vmul.f32 %v736, -0.00019511016
    %v738 = vadd.f32 %v737, 0.008332121
    %v739 = vmul.f32 %v736, %v738
    %v740 = vadd.f32 %v739, -0.16666654
    %v741 = vmul.f32 %v736, %v740
    %v742 = vadd.f32 %v741, 1.0
    %v743 = vmul.f32 %v742, %v727
    %vm744 = vweird.f32 %v600
    %v745 = vand.u32 %v728, 3
    %vm746 = vcmp.lt.s32.totalorder %v745, 2
    %vm747 = vcmp.eq.s32.totalorder %v745, 0
    %v748 = vxor.u32 %v743, 2147483648
    %v749 = vsel %vm747, %v735, %v748
    %vm750 = vcmp.eq.s32.totalorder %v745, 2
    %v751 = vxor.u32 %v735, 2147483648
    %v752 = vsel %vm750, %v751, %v743
    %v753 = vsel %vm746, %v749, %v752
    %v754 = vsel %vm744, nan, %v753
    %v755 = vand.u32 2147483647, %v600
    %vm756 = vcmp.le.f32.partialorder %v755, 0.7853982
    %vm757 = vcmp.lt.s32.totalorder %v600, 0
    %v758 = vand.u32 %v600, 2139095040
    %v759 = vshrl.u32 %v758, 23
    %v760 = vsub.s32 %v759, 127
    %v761 = vand.u32 2147483647, %v600
    %v762 = vand.u32 %v761, 8388607
    %v763 = vor.u32 %v762, 8388608
    %v764 = vsub.s32 0, %v763
    %v765 = vadd.s32 %v760, 1
    %vm766 = vcmp.gt.s32.totalorder %v765, 0
    %v767 = vsel %vm766, %v765, 0
    %v768 = vshrl.u32 %v767, 5
    %v769 = vand.u32 %v767, 31
    %v770 = vsub.s32 32, %v769
    %v771 = vshrl.u32 683565275, %v770
    %v772 = vshll.u32 683565275, %v769
    %v773 = vshrl.u32 2475754826, %v770
    %v774 = vor.u32 %v772, %v773
    %v775 = vshll.u32 2475754826, %v769
    %v776 = vshrl.u32 2131351028, %v770
    %v777 = vor.u32 %v775, %v776
    %v778 = vshll.u32 2131351028, %v769
    %v779 = vshrl.u32 2102212464, %v770
    %v780 = vor.u32 %v778, %v779
    %v781 = vshll.u32 2102212464, %v769
    %v782 = vshrl.u32 920167782, %v770
    %v783 = vor.u32 %v781, %v782
    %v784 = vshll.u32 920167782, %v769
    %v785 = vshrl.u32 1326507024, %v770
    %v786 = vor.u32 %v784, %v785
    %vm787 = vcmp.lt.s32.totalorder %v768, 1
    %vm788 = vcmp.lt.s32.totalorder %v768, 2
    %vm789 = vcmp.lt.s32.totalorder %v768, 3
    %vm790 = vcmp.lt.s32.totalorder %v768, 4
    %v791 = vsel %vm787, %v771, %v774
    %v792 = vsel %vm790, %v780, 2102212464
    %v793 = vsel %vm789, %v777, %v792
    %v794 = vsel %vm788, %v791, %v793
    %v795 = vsel %vm787, %v774, %v777
    %v796 = vsel %vm790, %v783, 920167782
    %v797 = vsel %vm789, %v780, %v796
    %v798 = vsel %vm788, %v795, %v797
    %v799 = vsel %vm787, %v777, %v780
    %v800 = vsel %vm790, %v786, 1326507024
    %v801 = vsel %vm789, %v783, %v800
    %v802 = vsel %vm788, %v799, %v801
    %v803 = vshll.u32 %v763, 8
    %v804 = vand.u32 %v803, 65535
    %v805 = vshrl.u32 %v803, 16
    %v806 = vand.u32 %v802, 65535
    %v807 = vshrl.u32 %v802, 16
    %v808 = vmul.u32 %v804, %v806
    %v809 = vmul.u32 %v804, %v807
    %v810 = vmul.u32 %v805, %v806
    %v811 = vmul.u32 %v805, %v807
    %v812 = vshll.u32 %v809, 16
    %v813 = vshrl.u32 %v809, 16
    %v814 = vshll.u32 %v810, 16
    %v815 = vshrl.u32 %v810, 16
    %vm816 = vc.u32 %v808, %v812
    %v817 = vsel %vm816, 1, 0
    %v818 = vadd.s32 %v808, %v812
    %v819 = vadd.s32 %v811, %v817
    %vm820 = vc.u32 %v818, %v814
    %v821 = vsel %vm820, 1, 0
    %v822 = vadd.s32 %v818, %v814
    %v823 = vadd.s32 %v819, %v821
    %v824 = vadd.s32 %v823, %v813
    %v825 = vadd.s32 %v824, %v815
    %v826 = vand.u32 %v803, 65535
    %v827 = vshrl.u32 %v803, 16
    %v828 = vand.u32 %v798, 65535
    %v829 = vshrl.u32 %v798, 16
    %v830 = vmul.u32 %v826, %v828
    %v831 = vmul.u32 %v826, %v829
    %v832 = vmul.u32 %v827, %v828
    %v833 = vmul.u32 %v827, %v829
    %v834 = vshll.u32 %v831, 16
    %v835 = vshrl.u32 %v831, 16
    %v836 = vshll.u32 %v832, 16
    %v837 = vshrl.u32 %v832, 16
    %vm838 = vc.u32 %v830, %v834
    %v839 = vsel %vm838, 1, 0
    %v840 = vadd.s32 %v830, %v834
    %v841 = vadd.s32 %v833, %v839
    %vm842 = vc.u32 %v840, %v836
    %v843 = vsel %vm842, 1, 0
    %v844 = vadd.s32 %v840, %v836
    %v845 = vadd.s32 %v841, %v843
    %v846 = vadd.s32 %v845, %v835
    %v847 = vadd.s32 %v846, %v837
    %v848 = vmul.u32 %v803, %v794
    %v849 = vadd.s32 %v825, %v844
    %vm850 = vc.u32 %v825, %v844
    %v851 = vadd.s32 %v847, 1
    %v852 = vsel %vm850, %v851, %v847
    %v853 = vadd.s32 %v848, %v852
    %v854 = vadd.s32 %v853, 536870912
    %v855 = vshrl.u32 %v854, 30
    %v856 = vshll.u32 %v855, 30
    %v857 = vsub.s32 %v853, %v856
    %vm858 = vcmp.lt.s32.totalorder %v857, 0
    %v859 = vsub.s32 0, %v857
    %v860 = vsel %vm858, %v859, %v857
    %v861 = vclz %v860
    %v862 = vsub.s32 %v861, 2
    %vm863 = vcmp.gt.s32.totalorder 0, %v862
    %v864 = vsel %vm863, 0, %v862
    %v865 = vsub.s32 32, %v864
    %v866 = vshll.u32 %v857, %v864
    %v867 = vshrl.u32 %v849, %v865
    %v868 = vor.u32 %v866, %v867
    %v869 = vsub.s32 4294967266, %v864
    %v870 = vadd.s32 %v869, 127
    %v871 = vshll.u32 %v870, 23
    %v872 = vor.u32 4788187, %v871
    %v873 = vand.u32 2147483647, %v872
    %v875 = vcvt.s32.f32 %v868
    %v876 = vmul.f32 %v875, %v873
    %v877 = vxor.u32 %v876, 2147483648
    %v878 = vsel %vm757, %v877, %v876
    %v879 = vsub.s32 4, %v855
    %v880 = vsel %vm757, %v879, %v855
    %v881 = vsel %vm756, %v600, %v878
    %v882 = vsel %vm756, 0, %v880
    %v883 = vmul.f32 %v881, %v881
    %v884 = vmul.f32 %v883, -0.001358992
    %v885 = vadd.f32 %v884, 0.041655596
    %v886 = vmul.f32 %v883, %v885
    %v887 = vadd.f32 %v886, -0.4999988
    %v888 = vmul.f32 %v883, %v887
    %v889 = vadd.f32 1.0, %v888
    %v890 = vmul.f32 %v881, %v881
    %v891 = vmul.f32 %v890, -0.00019511016
    %v892 = vadd.f32 %v891, 0.008332121
    %v893 = vmul.f32 %v890, %v892
    %v894 = vadd.f32 %v893, -0.16666654
    %v895 = vmul.f32 %v890, %v894
    %v896 = vadd.f32 %v895, 1.0
    %v897 = vmul.f32 %v896, %v881
    %vm898 = vweird.f32 %v600
    %v899 = vadd.s32 %v882, 3
    %v900 = vand.u32 %v899, 3
    %vm901 = vcmp.lt.s32.totalorder %v900, 2
    %vm902 = vcmp.eq.s32.totalorder %v900, 0
    %v903 = vxor.u32 %v897, 2147483648
    %v904 = vsel %vm902, %v889, %v903
    %vm905 = vcmp.eq.s32.totalorder %v900, 2
    %v906 = vxor.u32 %v889, 2147483648
    %v907 = vsel %vm905, %v906, %v897
    %v908 = vsel %vm901, %v904, %v907
    %v909 = vsel %vm898, nan, %v908
    %v910 = vmul.f32 %v405, %v754
    %v912 = vrot.slane %v909, 6
    %v914 = vmul.f32 %v405, %v912
    %v916 = vrot.slane %v914, 2
    %v918 = vsub.f32 %v910, %v916
    %v919 = vmul.f32 %v405, %v909
    %v921 = vrot.slane %v754, 6
    %v923 = vmul.f32 %v405, %v921
    %v925 = vrot.slane %v923, 2
    %v927 = vadd.f32 %v919, %v925
    %vm930 = vcmask 1046528
    %v931 = vrot.slane %v38, 1
    %v932 = vrot.slane %v39, 1
    %v933 = vsel %vm930, %v931, %v932
    %v936 = vmul.f32 %v37, %v933
    %v937 = vmul.f32 %v38, %v932
    %v939 = vrot.slane %v40, 1
    %v940 = vrot.slane %v41, 1
    %v941 = vsel %vm930, %v939, %v940
    %v944 = vmul.f32 %v39, %v941
    %v945 = vmul.f32 %v40, %v940
    %vm948 = vcmask 1045504
    %v949 = vrot.slane %v944, 2
    %v950 = vrot.slane %v945, 2
    %v951 = vsel %vm948, %v949, %v950
    %v954 = vadd.f32 %v936, %v951
    %v955 = vadd.f32 %v937, %v950
    %v956 = vrot.slane %v38, 7
    %v957 = vrot.slane %v39, 7
    %v958 = vsel %vm590, %v956, %v957
    %v961 = vmul.f32 %v39, %v956
    %v962 = vmul.f32 %v40, %v958
    %vm963 = vcmask 1044480
    %v964 = vrot.slane %v40, 3
    %v965 = vrot.slane %v41, 3
    %v966 = vsel %vm963, %v964, %v965
    %v969 = vmul.f32 %v37, %v966
    %v970 = vmul.f32 %v38, %v965
    %vm973 = vcmask 1041408
    %v974 = vrot.slane %v969, 6
    %v975 = vrot.slane %v970, 6
    %v976 = vsel %vm973, %v974, %v975
    %v979 = vsub.f32 %v961, %v974
    %v980 = vsub.f32 %v962, %v976
    %v981 = vld [vmem:[%s6] sm:$0x1]
    %vm982 = vcmask 72704
    %v984 = vsel %vm982, %v981, 0
    %v987 = vsel %vm590, %v955, 0
    %989 = vmatpush.msra.mxu0 0.0
    %990 = vmatpush.msra.mxu0 0.0
    %991 = vmatpush.msra.mxu0 0.0
    %992 = vmatpush.msra.mxu0 0.0
    %993 = vmatpush.msra.mxu0 0.0
    %994 = vmatpush.msra.mxu0 0.0
    %995 = vmatpush.msra.mxu0 0.0
    %996 = vmatpush.msra.mxu0 0.0
    %997 = vmatpush.msra.mxu0 0.0
    %998 = vmatpush.msra.mxu0 0.0
    %999 = vmatpush.msra.mxu0 0.0
    %1000 = vmatpush.msra.mxu0 0.0
    %1001 = vmatpush.msra.mxu0 0.0
    %1002 = vmatpush.msra.mxu0 0.0
    %1003 = vmatpush.msra.mxu0 %v987
    %1004 = vmatpush.msra.mxu0 %v954
    %1005 = vmatmul.f32.gmra.mxu0 %v984
    %v1006 = vpop.f32.mrf.mxu0
    %v1007 = vadd.f32 0.0, %v1006
    %1008 = vdwg.mxu0
    %v1011 = vrot.slane %v979, 2
    %v1012 = vrot.slane %v980, 2
    %v1013 = vsel %vm948, %v1011, %v1012
    %v1015 = vsel %vm590, %v1012, 0
    %1017 = vmatpush.msra.mxu0 0.0
    %1018 = vmatpush.msra.mxu0 0.0
    %1019 = vmatpush.msra.mxu0 0.0
    %1020 = vmatpush.msra.mxu0 0.0
    %1021 = vmatpush.msra.mxu0 0.0
    %1022 = vmatpush.msra.mxu0 0.0
    %1023 = vmatpush.msra.mxu0 0.0
    %1024 = vmatpush.msra.mxu0 0.0
    %1025 = vmatpush.msra.mxu0 0.0
    %1026 = vmatpush.msra.mxu0 0.0
    %1027 = vmatpush.msra.mxu0 0.0
    %1028 = vmatpush.msra.mxu0 0.0
    %1029 = vmatpush.msra.mxu0 0.0
    %1030 = vmatpush.msra.mxu0 0.0
    %1031 = vmatpush.msra.mxu0 %v1015
    %1032 = vmatpush.msra.mxu0 %v1013
    %1033 = vmatmul.f32.gmra.mxu0 %v984
    %v1034 = vpop.f32.mrf.mxu0
    %v1035 = vadd.f32 0.0, %v1034
    %1036 = vdwg.mxu0
    %v1038 = vrot.slane %v1007, 7
    %v1040 = vsel %vm590, %v1007, %v1038
    %v1041 = vsub.f32 0.0, %v1035
    %v1043 = vrot.slane %v1041, 7
    %v1045 = vsel %vm590, %v1035, %v1043
    %v1047 = vrot.slane %v405, 1
    %v1049 = vrot.slane %v405, 7
    %v1051 = vsel %vm590, %v1047, %v1049
    %v1052 = vrot.slane %v405, 3
    %v1054 = vsel %vm590, %v1052, %v1047
    %v1055 = vmul.f32 %v1040, %v1051
    %v1056 = vmul.f32 %v1045, %v1054
    %v1057 = vsub.f32 %v1055, %v1056
    %v1058 = vmul.f32 %v1040, %v1054
    %v1059 = vmul.f32 %v1045, %v1051
    %v1060 = vadd.f32 %v1058, %v1059
    %v1061 = vsub.f32 0.0, %v1060
    %v1062 = vld [vmem:[%s7] sm:$0xf]
    %v1063 = vadd.f32 %v550, %v918
    %v1064 = vadd.f32 %v1063, %v1061
    %v1065 = vrot.slane %v405, 4
    %v1067 = vadd.f32 %v1064, %v1065
    %v1068 = vperm.slane %v30, 1
    %v1069 = vmul.f32 %v1067, %v1068
    %1071 = vset.pattern.permute.xlu0 0
    %1072 = vperm.xlu0 %1071, %v1062
    %v1073 = vpop.permute.xlu0 %1072
    %v1075 = vadd.f32 %v1069, %v1073
    %v1077 = vrot.slane %v927, 6
    %v1079 = vadd.f32 %v550, %v1077
    %v1081 = vrot.slane %v1057, 6
    %v1083 = vadd.f32 %v1079, %v1081
    %v1084 = vadd.f32 %v1083, %v1065
    %v1085 = vmul.f32 %v1084, %v1068
    %v1086 = vadd.f32 %v1085, %v1073
    %v1087 = vsel %vm973, %v1075, %v1086
    %1088 = vst [vmem:[#allocation2] sm:$0xf] %v1087
    // Predicated region
    $region34: #{tpu_custom_call.1} parent=1 // pred_check
      _
    $region35: #{tpu_custom_call.1} parent=1 // pred_check_branch
      %1090 = sbr.rel (0) target = $region37
    $region36: #{tpu_custom_call.1} parent=1 // pred_region
      %1092 = vsyncadd [#allocation3], 0
      %s1094 = sshll.u32 [#allocation2], 4
      %s1095 = int_to_ptr.vmem [resolvable:$true] %s1094
      %s1096 = sshll.u32 %s8, 4
      %s1097 = int_to_ptr.hbm [resolvable:$true] %s1096
      %1099 = dma.vmem_to_hbm [thread:$0]  %s1095, 64, %s1097, [#allocation3]
    $region37: #{tpu_custom_call.1} parent=1 // pred_fallthru
      _
    // Predicated region
    $region38: #{tpu_custom_call.1} parent=1 // pred_check
      _
    $region39: #{tpu_custom_call.1} parent=1 // pred_check_branch
      %1101 = sbr.rel (0) target = $region41
    $region40: #{tpu_custom_call.1} parent=1 // pred_region
      %1103 = dma.done [#allocation3], 64
    $region41: #{tpu_custom_call.1} parent=1 // pred_fallthru
      _
    %1104 = vsyncpa [#allocation3], 1

</llo_original>
